<compile_context>
chip_gen: v6e
topology: v6e:2x2x1
jax: 0.10.0
libtpu: 0.0.40
codegen_flags: <defaults>
</compile_context>

<pallas_src>
import math

import jax
import jax.numpy as jnp
from jax.experimental import pallas as pl
from jax.experimental.pallas import tpu as pltpu


# ----------------------------- tuning knobs --------------------------------
_DMA_CHUNK_BYTES = 8 << 20    # ~8 MiB per HBM->HBM DMA chunk
_MAX_INFLIGHT = 4             # 2-4 outstanding copies keep DMA engines busy

_MAX_BLOCK_BYTES = 8 << 20    # VMEM-pipeline block size (4-8 MiB sweet spot)
_VMEM_LIMIT_BYTES = 48 << 20  # in+out double-buffered 8 MiB blocks = 32 MiB
_MIN_GRID = 4                 # v7x has 2 TensorCores; >=4 parallel blocks
_LANE = 128


def _flattened_dims(x):
    n = x.shape[0]
    f = math.prod(x.shape[1:])  # prod(()) == 1, so 1-D inputs give (N, 1)
    return n, f


# ---------------------------------------------------------------------------
# Primary: direct HBM->HBM chunked DMA copy (no VMEM round trip).
# ---------------------------------------------------------------------------
def flatten_hbm_dma(x: jax.Array) -> jax.Array:
    """`input.view(N, -1)` materialized via direct HBM->HBM DMAs."""
    n, f = _flattened_dims(x)
    itemsize = jnp.dtype(x.dtype).itemsize
    x2d = jnp.reshape(x, (n, f))  # free: row-major metadata collapse

    row_bytes = max(1, f * itemsize)
    rows_per_chunk = max(1, _DMA_CHUNK_BYTES // row_bytes)
    starts = tuple(range(0, n, rows_per_chunk))
    n_sems = max(1, min(_MAX_INFLIGHT, len(starts)))

    def kernel(x_ref, o_ref):
        if len(starts) <= 1:
            # Small tensor: a single whole-array HBM->HBM DMA.
            def body(sem):
                cp = pltpu.make_async_copy(x_ref, o_ref, sem)
                cp.start()
                cp.wait()

            pl.run_scoped(body, pltpu.SemaphoreType.DMA)
        else:
            # Chunk along rows; keep up to _MAX_INFLIGHT copies outstanding so
            # multiple DMA engines stream concurrently at the HBM roofline.
            def body(sems):
                copies = []
                for ci, r0 in enumerate(starts):
                    rcnt = min(rows_per_chunk, n - r0)
                    cp = pltpu.make_async_copy(
                        x_ref.at[pl.ds(r0, rcnt)],
                        o_ref.at[pl.ds(r0, rcnt)],
                        sems.at[ci % n_sems],
                    )
                    if ci >= n_sems:
                        # Free this semaphore slot before reusing it.
                        copies[ci - n_sems].wait()
                    cp.start()
                    copies.append(cp)
                for cp in copies[-n_sems:]:
                    cp.wait()

            pl.run_scoped(body, pltpu.SemaphoreType.DMA((n_sems,)))

    return pl.pallas_call(
        kernel,
        out_shape=jax.ShapeDtypeStruct((n, f), x.dtype),
        in_specs=[pl.BlockSpec(memory_space=pl.ANY)],
        out_specs=pl.BlockSpec(memory_space=pl.ANY),
        cost_estimate=pl.CostEstimate(
            flops=0, transcendentals=0, bytes_accessed=2 * n * f * itemsize),
    )(x2d)


# ---------------------------------------------------------------------------
# Secondary: BlockSpec-pipelined VMEM copy (lane-dense, masked ragged edges).
# ---------------------------------------------------------------------------
def _copy_block_kernel(x_ref, o_ref):
    o_ref[...] = x_ref[...]


def _choose_block(n, f, itemsize):
    """Pick a lane-dense (block_rows, block_cols) tile <= _MAX_BLOCK_BYTES.

    Layout-legal on TPU: trailing block dim is a multiple of 128 or the full
    extent; second-to-last is a multiple of the dtype sublane pack or the
    full extent.  Ragged edges are handled by cdiv grids + Pallas masking, so
    there is no divisibility requirement (and no single-giant-block fallback
    that could blow VMEM)."""
    sublane = max(8, 32 // itemsize)  # 8 f32 / 16 bf16 / 32 int8
    total_bytes = n * f * itemsize

    if total_bytes <= _MAX_BLOCK_BYTES:
        br, bf = n, f                                   # one block
    elif f * itemsize * sublane <= _MAX_BLOCK_BYTES:
        # Split rows only; keep the full, lane-dense minor dim.
        br = (_MAX_BLOCK_BYTES // (f * itemsize)) // sublane * sublane
        br = min(br, n)
        bf = f
    else:
        # Rows too fat: split the minor dim too, in multiples of 128.
        br = n if n <= sublane else sublane
        bf = max(_LANE, (_MAX_BLOCK_BYTES // (br * itemsize)) // _LANE * _LANE)
        bf = min(bf, f)

    # v7x megacore: keep >= _MIN_GRID parallel blocks when there is enough
    # data for both TensorCores to matter (harmless no-op on v5e/v6e).
    if total_bytes >= 4 * (1 << 20):
        while pl.cdiv(n, br) * pl.cdiv(f, bf) < _MIN_GRID:
            if br > sublane:
                br = max(sublane, (br // 2) // sublane * sublane)
            elif bf > _LANE:
                bf = max(_LANE, (bf // 2) // _LANE * _LANE)
            else:
                break
    return br, bf


def flatten_vmem_pipeline(x: jax.Array) -> jax.Array:
    """Flatten with a lane-dense, double-buffered VMEM copy pipeline."""
    n, f = _flattened_dims(x)
    itemsize = jnp.dtype(x.dtype).itemsize
    x2d = jnp.reshape(x, (n, f))
    br, bf = _choose_block(n, f, itemsize)
    grid = (pl.cdiv(n, br), pl.cdiv(f, bf))
    return pl.pallas_call(
        _copy_block_kernel,
        out_shape=jax.ShapeDtypeStruct((n, f), x.dtype),
        grid=grid,
        in_specs=[pl.BlockSpec((br, bf), lambda i, j: (i, j))],
        out_specs=pl.BlockSpec((br, bf), lambda i, j: (i, j)),
        compiler_params=pltpu.CompilerParams(
            dimension_semantics=("parallel", "parallel"),
            vmem_limit_bytes=_VMEM_LIMIT_BYTES,
        ),
        cost_estimate=pl.CostEstimate(
            flops=0, transcendentals=0, bytes_accessed=2 * n * f * itemsize),
    )(x2d)


# ---------------------------------------------------------------------------
# Module-equivalent forward.
# ---------------------------------------------------------------------------
def flatten(x: jax.Array) -> jax.Array:
    """Pallas equivalent of torch `input.view(input.size(0), -1)`.

    Note: when no independently-owned buffer is required, the true zero-cost
    equivalent of `.view` is `jnp.reshape(x, (N, -1))` (metadata only); the
    Pallas path below is the HBM-roofline copy for when a fresh flattened
    buffer must be materialized.
    """
    return flatten_hbm_dma(x)


if __name__ == "__main__":
    key = jax.random.PRNGKey(0)
    # Small NCHW feature map consistent with the module: (2, 4, 16, 16)
    x = jax.random.normal(key, (2, 4, 16, 16), dtype=jnp.float32)
    ref = jnp.reshape(x, (x.shape[0], -1))  # == torch .view semantics

    # Primary: HBM->HBM DMA copy.
    out = jax.block_until_ready(flatten(x))
    assert out.shape == (2, 4 * 16 * 16), out.shape
    assert out.dtype == x.dtype
    assert bool(jnp.array_equal(out, ref))

    # Secondary: BlockSpec-pipelined VMEM copy.
    out2 = jax.block_until_ready(flatten_vmem_pipeline(x))
    assert out2.shape == ref.shape and out2.dtype == x.dtype
    assert bool(jnp.array_equal(out2, ref))

    print("KERNEL_OK")
</pallas_src>

<mosaic_0001>
module attributes {stable_mosaic.version = 11 : i64} {
  func.func @kernel(%arg0: memref<2x1024xf32, #tpu.memory_space<any>>, %arg1: memref<2x1024xf32, #tpu.memory_space<any>>) attributes {dimension_semantics = [], scalar_prefetch = 0 : i64, scratch_operands = 0 : i64, tpu.core_type = #tpu.core_type<tc>} {
    "tpu.region"() ({
      %0 = tpu.sem_alloc : memref<!tpu.dma_semaphore, #tpu.memory_space<semaphore_mem>>
      tpu.enqueue_dma source(%arg0 : memref<2x1024xf32, #tpu.memory_space<any>>) target(%arg1 : memref<2x1024xf32, #tpu.memory_space<any>>) target_semaphore(%0 : memref<!tpu.dma_semaphore, #tpu.memory_space<semaphore_mem>>)
      tpu.wait_dma2 semaphore(%0 : memref<!tpu.dma_semaphore, #tpu.memory_space<semaphore_mem>>) src(%arg0 : memref<2x1024xf32, #tpu.memory_space<any>>) dst(%arg1 : memref<2x1024xf32, #tpu.memory_space<any>>)
      tpu.yield
    }) : () -> ()
    return
  }
}

</mosaic_0001>

<llo_original>
// kernel: tpu_custom_call.1
$region0: #{tpu_custom_call.1}
  #allocation0 [shape = 'u32[]', space=smem, size = 0x4, offset = 0x4, fixed_abs, tag = 'smem constant byte address 0x4 - core index']
  #allocation1 [shape = 'u32[144,128]{1,0:T(1,128)}', space=vmem, size = 0x12000, scoped, tag = 'internal scratch']
  #allocation3 [shape = 's32[]', space=sflag, size = 0x4, offset = 0, fixed_abs, tag = 'sflag constant byte address 0x0 - dummy sync flag']
  #allocation4 [shape = 'u32[0]{0}', space=smem, size = 0, offset = 0, fixed_abs, tag = 'smem constant byte address 0x0 - null']
  %s0 = inlined_call_operand.hbm [shape: f32[2,1024], index: 0, kind: input, shape index: {}]
  %s1 = inlined_call_operand.hbm [shape: f32[2,1024], index: 1, kind: output, shape index: {}]
  %s2 = sld [smem:[#allocation0]]
  $region3: #{tpu_custom_call.1} parent=0
    _
  %s4 = ssub.s32 1, %s2
  %s5 = scalar_select 0, %s4, %s2
  $region2: #{tpu_custom_call.1} parent=0
    #allocation2 [shape = 's32[1]{0}', space=sflag, size = 0x4, scoped, tag = 'scoped memory for tpu_custom_call.1']
    %s7 = sshll.u32 1, 14
    %s8 = sxor.u32 4294967295, %s7
    %12 = dma.general %s0, 256, %s1, [#allocation2], 131072, [#allocation4], 0, 0
    %s13 = smul.u32 2, 1
    %s14 = smul.u32 %s13, 8
    %s15 = sshll.u32 %s14, 4
    %16 = dma.done [#allocation2], %s15

</llo_original>
